<compile_context>
chip_gen: v7x
topology: tpu7x:2x2x1
jax: 0.10.0
libtpu: 0.0.40
codegen_flags: <defaults>
</compile_context>

<pallas_src>
import functools

import jax
import jax.numpy as jnp
from jax.experimental import pallas as pl
from jax.experimental.pallas import tpu as pltpu


def _round_up(x: int, m: int) -> int:
    return (x + m - 1) // m * m


# ---------------------------------------------------------------------------
# Kernels
# ---------------------------------------------------------------------------

def _lookahead_kernel(x_ref, halo_ref, w_ref, o_ref, xbuf_ref, *, context: int):
    """One (t_tile, lane_tile) output block (context > 1).

    x_ref:    (t_tile, lane_tile)              current time tile (input dtype)
    halo_ref: (1, context-1, lane_tile)        first rows of the *next* time tile
                                               (zeros past the end of the sequence)
    w_ref:    (context, lane_tile)             depthwise taps, tiled over the batch fold
    o_ref:    (t_tile, lane_tile)              output block
    xbuf_ref: (t_tile + context-1, lane_tile)  f32 staging scratch (cast fused here)
    """
    t_tile = o_ref.shape[0]
    # Stage current block + lookahead halo contiguously in VMEM, casting to f32
    # exactly once, so every tap below is a plain shifted full-height slice
    # with no per-tap cast.
    xbuf_ref[:t_tile, :] = x_ref[...].astype(jnp.float32)
    xbuf_ref[t_tile:, :] = halo_ref[0].astype(jnp.float32)

    # Hoist the taps: load + cast once per block.
    w_all = w_ref[...].astype(jnp.float32)                  # (context, lane_tile)

    # context is a small static constant -> unrolled elementwise MACs on the VPU.
    # TODO(synk): on v7x (HBM no longer the hard ceiling) the misaligned sublane
    # slices could be replaced by pltpu.roll-based shifts and the staging copy
    # dropped; hidden under HBM on v5e/v6e so kept simple here.
    acc = xbuf_ref[:t_tile, :] * w_all[0:1, :]
    for c in range(1, context):
        acc = acc + xbuf_ref[c:c + t_tile, :] * w_all[c:c + 1, :]
    o_ref[...] = acc.astype(o_ref.dtype)


def _lookahead_ctx1_kernel(x_ref, w_ref, o_ref):
    """context == 1 degenerates to a per-lane scale; no halo / staging needed."""
    o_ref[...] = (x_ref[...].astype(jnp.float32)
                  * w_ref[...].astype(jnp.float32)).astype(o_ref.dtype)


# ---------------------------------------------------------------------------
# Tile selection
# ---------------------------------------------------------------------------

def _pick_lane_tile(nh_pad: int, max_lanes: int = 2048) -> int:
    """Widest 128-multiple tile (<= max_lanes) dividing the padded lane axis."""
    if nh_pad <= max_lanes:
        return nh_pad
    best = 128                      # nh_pad is a multiple of 128, so 128 always works
    for cand in range(128, max_lanes + 1, 128):
        if nh_pad % cand == 0:
            best = cand
    return best


def _pick_t_tile(T: int, lane_tile: int, num_nh: int, itemsize: int,
                 vmem_cap: int) -> int:
    """Largest multiple-of-8 time tile dividing T within the per-block budget,
    then shrunk (while keeping blocks >= ~1 MiB) to guarantee a multi-block grid."""
    small_vmem = vmem_cap <= 64 * 1024 * 1024          # v7x-class part (64 MiB/TC)
    target_block = (2 if small_vmem else 4) * 1024 * 1024
    min_block = 1 * 1024 * 1024
    row_bytes = lane_tile * itemsize

    cands = [t for t in range(8, T + 1, 8) if T % t == 0]
    if not cands:
        return T                                        # tiny / odd T: one full block
    fits = [t for t in cands if t * row_bytes <= target_block]
    t_tile = fits[-1] if fits else cands[0]

    # Guarantee prefetch/writeback overlap + megacore sharding when data allows,
    # keeping blocks >= ~1 MiB so the ~0.35 us per-grid-step overhead stays small.
    if num_nh * (T // t_tile) < 8:
        for want in (8, 2):
            picked = None
            for t in reversed(cands):
                if num_nh * (T // t) >= want and t * row_bytes >= min_block:
                    picked = t
                    break
            if picked is not None:
                t_tile = picked
                break
    return t_tile


# ---------------------------------------------------------------------------
# Wrapper
# ---------------------------------------------------------------------------

def lookahead_forward(x, weight, context: int, *, t_tile=None, lane_tile=None):
    """Forward pass of the DeepSpeech Lookahead layer.

    x: (T, N, H);  weight: (H, 1, context) as in nn.Conv1d(groups=H, bias=None).
    y[t, n, h] = sum_c x[t+c, n, h] * weight[h, 0, c]   (zero past the sequence end)
    """
    if context < 1:
        raise ValueError("context must be >= 1")
    T, N, H = x.shape
    NH = N * H
    dtype = x.dtype

    # Fold (N, H) onto the lane axis (the op is independent per (n, h)), and pad
    # the fold to a multiple of 128 so every store is a full, unmasked vst.
    x2 = x.reshape(T, NH)
    w2 = jnp.tile(jnp.transpose(weight[:, 0, :], (1, 0)), (1, N))    # (context, NH)
    NH_pad = _round_up(NH, 128)
    if NH_pad != NH:
        x2 = jnp.pad(x2, ((0, 0), (0, NH_pad - NH)))
        w2 = jnp.pad(w2, ((0, 0), (0, NH_pad - NH)))

    try:
        vmem_cap = int(pltpu.get_tpu_info().vmem_capacity_bytes)
    except Exception:
        vmem_cap = 64 * 1024 * 1024                     # conservative (v7x-sized)

    if lane_tile is None:
        lane_tile = _pick_lane_tile(NH_pad)
    if NH_pad % lane_tile != 0:
        raise ValueError(f"lane_tile={lane_tile} must divide padded N*H={NH_pad}")
    if lane_tile != NH_pad and lane_tile % 128 != 0:
        raise ValueError(f"lane_tile={lane_tile} must be a multiple of 128")
    num_nh = NH_pad // lane_tile

    if t_tile is None:
        t_tile = _pick_t_tile(T, lane_tile, num_nh, dtype.itemsize, vmem_cap)
    if T % t_tile != 0 or (t_tile != T and t_tile % 8 != 0):
        raise ValueError(f"t_tile={t_tile} must divide T={T} and be a multiple of 8")
    num_t = T // t_tile

    dim_sems = ("parallel", "parallel")

    # ---- context == 1 fast path: pure per-lane scale --------------------------
    if context == 1:
        est_vmem = (4 * t_tile * lane_tile * dtype.itemsize       # x + out dbl buffers
                    + 2 * lane_tile * w2.dtype.itemsize           # taps dbl buffer
                    + 2 * t_tile * lane_tile * 4)                 # f32 temporaries
        vmem_limit = int(min(48 * 1024 * 1024, 3 * vmem_cap // 4,
                             max(16 * 1024 * 1024, 2 * est_vmem)))
        out2 = pl.pallas_call(
            _lookahead_ctx1_kernel,
            out_shape=jax.ShapeDtypeStruct((T, NH_pad), dtype),
            grid_spec=pltpu.PrefetchScalarGridSpec(
                num_scalar_prefetch=0,
                grid=(num_nh, num_t),                            # time innermost
                in_specs=[
                    pl.BlockSpec((t_tile, lane_tile), lambda j, i: (i, j)),
                    pl.BlockSpec((1, lane_tile), lambda j, i: (0, j)),
                ],
                out_specs=pl.BlockSpec((t_tile, lane_tile), lambda j, i: (i, j)),
            ),
            compiler_params=pltpu.CompilerParams(
                dimension_semantics=dim_sems, vmem_limit_bytes=vmem_limit),
        )(x2, w2)
        return out2[:, :NH].reshape(T, N, H)

    # ---- context > 1: halo side-input + staged taps ---------------------------
    halo_rows = context - 1
    # Per-time-tile lookahead halo: first (context-1) rows of the next tile,
    # zero-filled past the end of the sequence (replaces a full-tensor HBM pad).
    # Rows are globally indexed, so this stays correct even if context-1 > t_tile.
    row_idx = ((jnp.arange(num_t)[:, None] + 1) * t_tile
               + jnp.arange(halo_rows)[None, :])                 # (num_t, halo_rows)
    valid = (row_idx < T).reshape(-1, 1)
    gathered = jnp.take(x2, jnp.clip(row_idx, 0, T - 1).reshape(-1), axis=0)
    halo = jnp.where(valid, gathered, 0).astype(dtype).reshape(num_t, halo_rows, NH_pad)

    est_vmem = (
        4 * t_tile * lane_tile * dtype.itemsize                  # x + out dbl buffers
        + (t_tile + halo_rows) * lane_tile * 4                   # f32 staging scratch
        + 2 * halo_rows * lane_tile * dtype.itemsize             # halo dbl buffer
        + 2 * context * lane_tile * w2.dtype.itemsize            # taps dbl buffer
        + 2 * t_tile * lane_tile * 4                             # f32 accumulator temps
    )
    vmem_limit = int(min(48 * 1024 * 1024, 3 * vmem_cap // 4,
                         max(16 * 1024 * 1024, 2 * est_vmem)))

    kernel = functools.partial(_lookahead_kernel, context=context)
    out2 = pl.pallas_call(
        kernel,
        out_shape=jax.ShapeDtypeStruct((T, NH_pad), dtype),
        grid_spec=pltpu.PrefetchScalarGridSpec(
            num_scalar_prefetch=0,
            grid=(num_nh, num_t),                                # time innermost:
            in_specs=[                                           # taps DMA elided per step
                pl.BlockSpec((t_tile, lane_tile), lambda j, i: (i, j)),
                pl.BlockSpec((1, halo_rows, lane_tile), lambda j, i: (i, 0, j)),
                pl.BlockSpec((context, lane_tile), lambda j, i: (0, j)),
            ],
            out_specs=pl.BlockSpec((t_tile, lane_tile), lambda j, i: (i, j)),
            scratch_shapes=[pltpu.VMEM((t_tile + halo_rows, lane_tile), jnp.float32)],
        ),
        compiler_params=pltpu.CompilerParams(
            dimension_semantics=dim_sems, vmem_limit_bytes=vmem_limit),
    )(x2, halo, w2)
    return out2[:, :NH].reshape(T, N, H)


# ---------------------------------------------------------------------------
# Reference + tests
# ---------------------------------------------------------------------------

def lookahead_reference(x, weight, context: int):
    """Pure-JAX reference matching the PyTorch module."""
    T, N, H = x.shape
    x_pad = jnp.pad(x, ((0, context - 1), (0, 0), (0, 0)))
    w = jnp.transpose(weight[:, 0, :], (1, 0))  # (context, H)
    out = jnp.zeros((T, N, H), jnp.float32)
    for c in range(context):
        out = out + x_pad[c:c + T].astype(jnp.float32) * w[c][None, None, :]
    return out.astype(x.dtype)


if __name__ == "__main__":
    key = jax.random.PRNGKey(0)
    kx, kw, kx2, kw2, kx3, kw3 = jax.random.split(key, 6)

    # Test 1: module-scale shapes (NH = 64 gets lane-padded to 128). x is (T, N, H).
    T, N, H, context = 8, 2, 32, 3
    x = jax.random.normal(kx, (T, N, H), dtype=jnp.float32)
    bound = 1.0 / (1.0 * context) ** 0.5
    weight = jax.random.uniform(kw, (H, 1, context), dtype=jnp.float32,
                                minval=-bound, maxval=bound)
    y = jax.block_until_ready(lookahead_forward(x, weight, context))
    y_ref = lookahead_reference(x, weight, context)
    assert y.shape == (T, N, H)
    assert jnp.allclose(y, y_ref, atol=1e-5, rtol=1e-5)

    # Test 2: force the multi-tile path (time tiling with halo + lane tiling).
    T2, N2, H2, context2 = 24, 2, 128, 4
    xb = jax.random.normal(kx2, (T2, N2, H2), dtype=jnp.float32)
    bound2 = 1.0 / (1.0 * context2) ** 0.5
    wb = jax.random.uniform(kw2, (H2, 1, context2), dtype=jnp.float32,
                            minval=-bound2, maxval=bound2)
    yb = jax.block_until_ready(
        lookahead_forward(xb, wb, context2, t_tile=8, lane_tile=128))
    yb_ref = lookahead_reference(xb, wb, context2)
    assert jnp.allclose(yb, yb_ref, atol=1e-5, rtol=1e-5)

    # Test 3: context == 1 fast path (pure per-lane scale, no halo input).
    T3, N3, H3, context3 = 8, 2, 64, 1
    xc = jax.random.normal(kx3, (T3, N3, H3), dtype=jnp.float32)
    wc = jax.random.uniform(kw3, (H3, 1, context3), dtype=jnp.float32,
                            minval=-1.0, maxval=1.0)
    yc = jax.block_until_ready(lookahead_forward(xc, wc, context3))
    yc_ref = lookahead_reference(xc, wc, context3)
    assert jnp.allclose(yc, yc_ref, atol=1e-5, rtol=1e-5)

    print("KERNEL_OK")
</pallas_src>

<mosaic_0001>
module attributes {stable_mosaic.version = 11 : i64} {
  func.func @_lookahead_kernel(%arg0: i32, %arg1: i32, %arg2: memref<8x128xf32, #tpu.memory_space<vmem>>, %arg3: memref<1x2x128xf32, #tpu.memory_space<vmem>>, %arg4: memref<3x128xf32, #tpu.memory_space<vmem>>, %arg5: memref<8x128xf32, #tpu.memory_space<vmem>>, %arg6: memref<10x128xf32, #tpu.memory_space<vmem>>) attributes {dimension_semantics = [#tpu.dimension_semantics<parallel>, #tpu.dimension_semantics<parallel>], iteration_bounds = array<i64: 1, 1>, scalar_prefetch = 0 : i64, scratch_operands = 1 : i64, tpu.core_type = #tpu.core_type<tc>, window_params = [{transform_indices = @transform_0, window_bounds = array<i64: 8, 128>}, {transform_indices = @transform_1, window_bounds = array<i64: 1, 2, 128>}, {transform_indices = @transform_2, window_bounds = array<i64: 3, 128>}, {transform_indices = @transform_3, window_bounds = array<i64: 8, 128>}]} {
    %c0 = arith.constant 0 : index
    %c0_0 = arith.constant 0 : index
    %0 = vector.load %arg2[%c0, %c0_0] : memref<8x128xf32, #tpu.memory_space<vmem>>, vector<8x128xf32>
    %c0_1 = arith.constant 0 : index
    %c0_2 = arith.constant 0 : index
    %1 = vector.load %arg6[%c0_1, %c0_2] : memref<10x128xf32, #tpu.memory_space<vmem>>, vector<8x128xf32>
    tpu.vector_store %arg6[%c0_1, %c0_2], %0 {strides = array<i32>} : memref<10x128xf32, #tpu.memory_space<vmem>>, vector<8x128xf32>,
    %c0_3 = arith.constant 0 : index
    %c0_4 = arith.constant 0 : index
    %c0_5 = arith.constant 0 : index
    %2 = vector.load %arg3[%c0_3, %c0_4, %c0_5] : memref<1x2x128xf32, #tpu.memory_space<vmem>>, vector<1x2x128xf32>
    %3 = vector.shape_cast %2 : vector<1x2x128xf32> to vector<2x128xf32>
    %c8 = arith.constant 8 : index
    %c0_6 = arith.constant 0 : index
    %4 = vector.load %arg6[%c8, %c0_6] : memref<10x128xf32, #tpu.memory_space<vmem>>, vector<2x128xf32>
    tpu.vector_store %arg6[%c8, %c0_6], %3 {strides = array<i32>} : memref<10x128xf32, #tpu.memory_space<vmem>>, vector<2x128xf32>,
    %c0_7 = arith.constant 0 : index
    %c0_8 = arith.constant 0 : index
    %5 = vector.load %arg4[%c0_7, %c0_8] : memref<3x128xf32, #tpu.memory_space<vmem>>, vector<3x128xf32>
    %c0_9 = arith.constant 0 : index
    %c0_10 = arith.constant 0 : index
    %6 = vector.load %arg6[%c0_9, %c0_10] : memref<10x128xf32, #tpu.memory_space<vmem>>, vector<8x128xf32>
    %7 = vector.extract_strided_slice %5 {offsets = [0, 0], sizes = [1, 128], strides = [1, 1]} : vector<3x128xf32> to vector<1x128xf32>
    %8 = vector.broadcast %7 : vector<1x128xf32> to vector<8x128xf32>
    %9 = arith.mulf %6, %8 : vector<8x128xf32>
    %c1 = arith.constant 1 : index
    %c0_11 = arith.constant 0 : index
    %10 = vector.load %arg6[%c1, %c0_11] : memref<10x128xf32, #tpu.memory_space<vmem>>, vector<8x128xf32>
    %11 = vector.extract_strided_slice %5 {offsets = [1, 0], sizes = [1, 128], strides = [1, 1]} : vector<3x128xf32> to vector<1x128xf32>
    %12 = vector.broadcast %11 : vector<1x128xf32> to vector<8x128xf32>
    %13 = arith.mulf %10, %12 : vector<8x128xf32>
    %14 = arith.addf %9, %13 : vector<8x128xf32>
    %c2 = arith.constant 2 : index
    %c0_12 = arith.constant 0 : index
    %15 = vector.load %arg6[%c2, %c0_12] : memref<10x128xf32, #tpu.memory_space<vmem>>, vector<8x128xf32>
    %16 = vector.extract_strided_slice %5 {offsets = [2, 0], sizes = [1, 128], strides = [1, 1]} : vector<3x128xf32> to vector<1x128xf32>
    %17 = vector.broadcast %16 : vector<1x128xf32> to vector<8x128xf32>
    %18 = arith.mulf %15, %17 : vector<8x128xf32>
    %19 = arith.addf %14, %18 : vector<8x128xf32>
    %c0_13 = arith.constant 0 : index
    %c0_14 = arith.constant 0 : index
    %20 = vector.load %arg5[%c0_13, %c0_14] : memref<8x128xf32, #tpu.memory_space<vmem>>, vector<8x128xf32>
    tpu.vector_store %arg5[%c0_13, %c0_14], %19 {strides = array<i32>} : memref<8x128xf32, #tpu.memory_space<vmem>>, vector<8x128xf32>,
    return
  }
  func.func @transform_0(%arg0: i32, %arg1: i32) -> (i32, i32) {
    %c0_i32 = arith.constant 0 : i32
    return %arg1, %arg0 : i32, i32
  }
  func.func @transform_1(%arg0: i32, %arg1: i32) -> (i32, i32, i32) {
    %c0_i32 = arith.constant 0 : i32
    %c0_i32_0 = arith.constant 0 : i32
    return %arg1, %c0_i32, %arg0 : i32, i32, i32
  }
  func.func @transform_2(%arg0: i32, %arg1: i32) -> (i32, i32) {
    %c0_i32 = arith.constant 0 : i32
    %c0_i32_0 = arith.constant 0 : i32
    return %c0_i32, %arg0 : i32, i32
  }
  func.func @transform_3(%arg0: i32, %arg1: i32) -> (i32, i32) {
    %c0_i32 = arith.constant 0 : i32
    return %arg1, %arg0 : i32, i32
  }
}

</mosaic_0001>

<llo_original>
// kernel: tpu_custom_call.1
$region0: #{tpu_custom_call.1}
  #allocation0 [shape = 'u32[]', space=smem, size = 0x4, offset = 0x4, fixed_abs, tag = 'smem constant byte address 0x4 - core index']
  #allocation1 [shape = 'u32[144,128]{1,0:T(1,128)}', space=vmem, size = 0x12000, scoped, tag = 'internal scratch']
  #allocation2 [shape = 'f32[10,128]{1,0:T(8,128)}', space=vmem, size = 0x2000, scoped, tag = 'scratch operand']
  %s0 = inlined_call_operand.hbm [shape: f32[8,128], index: 0, kind: input, shape index: {}]
  %s1 = inlined_call_operand.vmem [shape: f32[1,2,128], index: 1, kind: input, shape index: {}]
  %s2 = inlined_call_operand.vmem [shape: f32[3,128], index: 2, kind: input, shape index: {}]
  %s3 = inlined_call_operand.hbm [shape: f32[8,128], index: 3, kind: output, shape index: {}]
  %s4 = sld [smem:[#allocation0]]
  $region26: #{tpu_custom_call.1} parent=0
    _
  %s6 = ssub.s32 1, %s4
  %s7 = scalar_select 0, %s6, %s4
  $region1: #{tpu_custom_call.1} parent=0
    #allocation3 [shape = 'u8[4096]{0}', space=vmem, size = 0x1000, scoped, tag = 'input window, operand 0, single buffered']
    #allocation4 [shape = 's32[1]{0}', space=sflag, size = 0x4, scoped, tag = 'scoped memory for tpu_custom_call.1']
    #allocation5 [shape = 's32[1]{0}', space=sflag, size = 0x4, scoped, tag = 'scoped memory for tpu_custom_call.1']
    #allocation6 [shape = 'u8[4096]{0}', space=vmem, size = 0x1000, scoped, tag = 'output window, operand 0, single buffered']
    %8 = vsyncpa [#allocation4], 0
    %9 = vsyncpa [#allocation5], 0
    // Predicated region
    $region2: #{tpu_custom_call.1} parent=1 // pred_check
      _
    $region3: #{tpu_custom_call.1} parent=1 // pred_check_branch
      %11 = sbr.rel (0) target = $region5
    $region4: #{tpu_custom_call.1} parent=1 // pred_region
      %s13 = ssub.s32 128, 128
      %14 = vsyncadd [#allocation4], %s13
      %s16 = sshll.u32 [#allocation3], 4
      %s17 = int_to_ptr.vmem [resolvable:$true] %s16
      %19 = dma.hbm_to_vmem [thread:$0]  %s0, 128, %s17, [#allocation4]
    $region5: #{tpu_custom_call.1} parent=1 // pred_fallthru
      _
    // Predicated region
    $region6: #{tpu_custom_call.1} parent=1 // pred_check
      _
    $region7: #{tpu_custom_call.1} parent=1 // pred_check_branch
      %21 = sbr.rel (0) target = $region9
    $region8: #{tpu_custom_call.1} parent=1 // pred_region
      _
    $region9: #{tpu_custom_call.1} parent=1 // pred_fallthru
      _
    // Predicated region
    $region10: #{tpu_custom_call.1} parent=1 // pred_check
      _
    $region11: #{tpu_custom_call.1} parent=1 // pred_check_branch
      %23 = sbr.rel (0) target = $region13
    $region12: #{tpu_custom_call.1} parent=1 // pred_region
      _
    $region13: #{tpu_custom_call.1} parent=1 // pred_fallthru
      _
    // Predicated region
    $region14: #{tpu_custom_call.1} parent=1 // pred_check
      _
    $region15: #{tpu_custom_call.1} parent=1 // pred_check_branch
      %25 = sbr.rel (0) target = $region17
    $region16: #{tpu_custom_call.1} parent=1 // pred_region
      %26 = dma.done [#allocation4], 128
    $region17: #{tpu_custom_call.1} parent=1 // pred_fallthru
      _
    %v27 = vld [vmem:[#allocation3] sm:$0xff]
    %28 = vst [vmem:[#allocation2] sm:$0xff] %v27
    %v29 = vld [vmem:[%s1] sm:$0x3]
    %30 = vst [vmem:[#allocation2 + $0x8] sm:$0x3] %v29
    %v31 = vld [vmem:[%s2] sm:$0x7]
    %v32 = vld [vmem:[#allocation2] sm:$0xff]
    %v33 = vlaneseq
    %v34 = vshrl.u32 %v33, 7
    %v35 = vsub.s32 0, %v34
    %v36 = vrot.slane %v31, %v35
    %v37 = vmul.f32 %v32, %v36
    %v38 = vld [vmem:[#allocation2 + $0x1] sm:$0xff]
    %v39 = vlaneseq
    %v40 = vshrl.u32 %v39, 7
    %v41 = vsub.s32 1, %v40
    %v42 = vrot.slane %v31, %v41
    %v43 = vmul.f32 %v38, %v42
    %v44 = vadd.f32 %v37, %v43
    %v45 = vld [vmem:[#allocation2 + $0x2] sm:$0xff]
    %v46 = vlaneseq
    %v47 = vshrl.u32 %v46, 7
    %v48 = vsub.s32 2, %v47
    %v49 = vrot.slane %v31, %v48
    %v50 = vmul.f32 %v45, %v49
    %v51 = vadd.f32 %v44, %v50
    %52 = vst [vmem:[#allocation6] sm:$0xff] %v51
    // Predicated region
    $region18: #{tpu_custom_call.1} parent=1 // pred_check
      _
    $region19: #{tpu_custom_call.1} parent=1 // pred_check_branch
      %54 = sbr.rel (0) target = $region21
    $region20: #{tpu_custom_call.1} parent=1 // pred_region
      %s56 = ssub.s32 128, 128
      %57 = vsyncadd [#allocation5], %s56
      %s59 = sshll.u32 [#allocation6], 4
      %s60 = int_to_ptr.vmem [resolvable:$true] %s59
      %62 = dma.vmem_to_hbm [thread:$0]  %s60, 128, %s3, [#allocation5]
    $region21: #{tpu_custom_call.1} parent=1 // pred_fallthru
      _
    // Predicated region
    $region22: #{tpu_custom_call.1} parent=1 // pred_check
      _
    $region23: #{tpu_custom_call.1} parent=1 // pred_check_branch
      %64 = sbr.rel (0) target = $region25
    $region24: #{tpu_custom_call.1} parent=1 // pred_region
      %65 = dma.done [#allocation5], 128
    $region25: #{tpu_custom_call.1} parent=1 // pred_fallthru
      _
    %66 = vsyncpa [#allocation4], 1
    %67 = vsyncpa [#allocation5], 1

</llo_original>
